<compile_context>
chip_gen: v6e
topology: v6e:2x2x1
jax: 0.10.0
libtpu: 0.0.40
codegen_flags: <defaults>
</compile_context>

<pallas_src>
import functools

import jax
import jax.numpy as jnp
from jax.experimental import pallas as pl
from jax.experimental.pallas import tpu as pltpu


# ----------------------------- Pallas kernel ------------------------------- #
def _reward_kernel(x_ref, temb_ref, w1t_ref, w2_ref, o_ref, *,
                   bt, C, grid_steps, inv_hw):
    """One grid step = `bt` samples, activations lane-dense as (HID, HW).

    x_ref:    (bt*C, HW)  NCHW flattened, fully dense (no sublane padding)
    temb_ref: (HID, B)    per-sample time embedding (+ b1 folded), resident
    w1t_ref:  (HID, C)    transposed 1x1-conv weight, resident
    w2_ref:   (HID, 1)    reward-head weight, resident (b2 added in wrapper)
    o_ref:    (1, 1, bt)  per-sample rewards, written once, lane-dense in bt
    """
    w2 = w2_ref[...]                                   # (HID, 1), loaded once
    cols = []
    for b in range(bt):                                # static unroll, bt <= 8
        # K = C contraction on the VPU: C broadcast FMAs instead of a tiny
        # (HID,C)@(C,HW) MXU matmul (K=4 wastes the MXU and pays its latency).
        wx = w1t_ref[:, 0:1] * x_ref[b * C:b * C + 1, :]          # (HID, HW)
        for c in range(1, C):
            wx = wx + w1t_ref[:, c:c + 1] * x_ref[b * C + c:b * C + c + 1, :]
        if grid_steps == 1:
            tcol = temb_ref[:, b:b + 1]                           # (HID, 1)
        else:
            tcol = temb_ref[:, pl.ds(pl.program_id(0) * bt + b, 1)]
        h = wx + tcol                                             # (HID, HW)
        a = h * jax.nn.sigmoid(h)                                 # SiLU (VPU+EUP)
        cols.append(jnp.sum(a, axis=1, keepdims=True))            # (HID, 1) lane reduce
    row_sums = jnp.concatenate(cols, axis=1) if bt > 1 else cols[0]  # (HID, bt)
    # Fused head: mean_p( w2 . a[:, p] ) == (w2 . row_sums) * (1/HW).
    out_row = jnp.sum(row_sums * w2, axis=0, keepdims=True) * inv_hw  # (1, bt)
    o_ref[...] = out_row.reshape(1, 1, bt)


def _choose_batch_tile(batch, channels, hw, max_unroll=8, vmem_budget=8 << 20):
    """Pick the per-step batch tile `bt` and grid length G = batch // bt.

    Prefers bt == batch (a single grid step) whenever the double-buffered x
    block fits a conservative VMEM budget (generation-safe: well under v7x's
    64 MiB as well as v5e/v6e's 128 MiB).  Splitting only happens for large
    batches, where each shard carries enough work to amortize the ~0.35 us
    per-grid-step overhead and the "parallel" batch axis can feed both v7x
    TensorCores.  Tiles smaller than the full batch must keep the x block's
    sublane extent (bt*C) a multiple of 8.
    """
    per_sample_bytes = channels * hw * 4                 # f32
    best = 1
    for d in range(1, batch + 1):
        if batch % d != 0 or d > max_unroll:
            continue
        if 2 * d * per_sample_bytes > vmem_budget:       # double-buffered x block
            continue
        if d != batch and (d * channels) % 8 != 0:
            continue
        best = max(best, d)
    return best, batch // best


def _reward_model_pallas(x_flat, temb_t, w1t, w2, *, B, C, HW, bt, G):
    """x_flat: (B*C, HW) f32, temb_t: (HID, B) f32 -> reward (B,) f32."""
    HID = w1t.shape[0]
    kernel = functools.partial(
        _reward_kernel, bt=bt, C=C, grid_steps=G, inv_hw=1.0 / HW)

    cost = pl.CostEstimate(
        flops=int(2 * B * HW * HID * (C + 2)),
        transcendentals=int(B * HW * HID),
        bytes_accessed=int(4 * (x_flat.size + temb_t.size + w1t.size + w2.size + B)),
    )

    grid_spec = pltpu.PrefetchScalarGridSpec(
        num_scalar_prefetch=0,
        grid=(G,),
        in_specs=[
            pl.BlockSpec((bt * C, HW), lambda g: (g, 0)),   # x tile (dense)
            pl.BlockSpec((HID, B), lambda g: (0, 0)),       # temb (+b1), resident
            pl.BlockSpec((HID, C), lambda g: (0, 0)),       # W1^T, resident
            pl.BlockSpec((HID, 1), lambda g: (0, 0)),       # W2,   resident
        ],
        out_specs=pl.BlockSpec((1, 1, bt), lambda g: (g, 0, 0)),
    )

    out = pl.pallas_call(
        kernel,
        out_shape=jax.ShapeDtypeStruct((G, 1, bt), jnp.float32),
        grid_spec=grid_spec,
        cost_estimate=cost,
        compiler_params=pltpu.CompilerParams(
            dimension_semantics=("parallel",)),
    )(x_flat, temb_t, w1t, w2)
    return out.reshape(B)


# ------------------------------- JAX glue ----------------------------------- #
def _timestep_embedding(t, dim):
    """Standard sinusoidal embedding, t: (B,) -> (B, dim)."""
    half = dim // 2
    freqs = jnp.exp(-jnp.log(10000.0) * jnp.arange(half, dtype=jnp.float32) / half)
    args = t.astype(jnp.float32)[:, None] * freqs[None, :]
    return jnp.concatenate([jnp.cos(args), jnp.sin(args)], axis=-1)


class GradientRewardRegressorPallas:
    """JAX/Pallas equivalent of GradientRewardRegressor.forward(x_t, t)."""

    def __init__(self, channels=4, hidden=32, n_timesteps=50, key=None):
        self.n_timesteps = n_timesteps
        self.diffusion_predicts_mean = True
        self.scale_scores = False
        key = jax.random.PRNGKey(0) if key is None else key
        k1, k2, k3 = jax.random.split(key, 3)
        # Deterministic parameter init (synthetic reward-model weights).
        self.w_t = jax.random.normal(k1, (hidden, hidden), jnp.float32) * 0.05
        self.w1 = jax.random.normal(k2, (channels, hidden), jnp.float32) * 0.1
        self.w1t = jnp.transpose(self.w1)          # (HID, C) for the lane-dense kernel
        self.b1 = jnp.zeros((1, hidden), jnp.float32)
        self.w2 = jax.random.normal(k3, (hidden, 1), jnp.float32) * 0.1
        self.b2 = jnp.zeros((1, 1), jnp.float32)
        self.hidden = hidden
        self.channels = channels

    @functools.partial(jax.jit, static_argnums=0)
    def forward(self, x_t, t):
        # x_t: (B, C, H, W) NCHW float32, t: (B,) int32
        B, C, H, W = x_t.shape
        HW = H * W
        # Native NCHW flattening (contiguous, no transpose): fully dense x tile.
        x_flat = x_t.reshape(B * C, HW)
        # Timestep embedding + projection (tiny glue); b1 folded in here.
        temb = _timestep_embedding(t, self.hidden) @ self.w_t + self.b1   # (B, HID)
        temb_t = jnp.transpose(temb)                                      # (HID, B)
        bt, G = _choose_batch_tile(B, C, HW)
        reward = _reward_model_pallas(x_flat, temb_t, self.w1t, self.w2,
                                      B=B, C=C, HW=HW, bt=bt, G=G)        # (B,)
        # b2 folded outside the kernel (single scalar add).
        return reward.reshape(B, 1) + self.b2.reshape(1, 1)               # (B, 1)

    def __call__(self, x_t, t):
        return self.forward(x_t, t)


def _reference_forward(model, x_t, t):
    """Pure-JAX reference in the original channels-last formulation."""
    B, C, H, W = x_t.shape
    x_pix = jnp.transpose(x_t, (0, 2, 3, 1)).reshape(B, H * W, C)
    temb = _timestep_embedding(t, model.hidden) @ model.w_t               # (B, HID)
    h = x_pix @ model.w1 + model.b1[None] + temb[:, None, :]
    a = h * jax.nn.sigmoid(h)
    r = a @ model.w2 + model.b2[None]
    return jnp.mean(r, axis=1)                                            # (B, 1)


# --------------------------------- main -------------------------------------- #
if __name__ == "__main__":
    key = jax.random.PRNGKey(0)
    kx, kt = jax.random.split(key)

    B, C, H, W = 2, 4, 16, 16
    x_t = jax.random.normal(kx, (B, C, H, W), jnp.float32)
    t = jax.random.randint(kt, (B,), 0, 50).astype(jnp.int32)

    model = GradientRewardRegressorPallas(channels=C, hidden=32, n_timesteps=50)
    out = jax.block_until_ready(model(x_t, t))

    assert out.shape == (B, 1) and out.dtype == jnp.float32
    ref = _reference_forward(model, x_t, t)
    assert jnp.allclose(out, ref, rtol=5e-2, atol=5e-3), (out, ref)

    print("KERNEL_OK")
</pallas_src>

<mosaic_0001>
module attributes {stable_mosaic.version = 11 : i64} {
  func.func @_reward_kernel(%arg0: i32, %arg1: memref<8x256xf32, #tpu.memory_space<vmem>>, %arg2: memref<32x2xf32, #tpu.memory_space<vmem>>, %arg3: memref<32x4xf32, #tpu.memory_space<vmem>>, %arg4: memref<32x1xf32, #tpu.memory_space<vmem>>, %arg5: memref<1x1x2xf32, #tpu.memory_space<vmem>>) attributes {dimension_semantics = [#tpu.dimension_semantics<parallel>], iteration_bounds = array<i64: 1>, scalar_prefetch = 0 : i64, scratch_operands = 0 : i64, tpu.core_type = #tpu.core_type<tc>, window_params = [{transform_indices = @transform_0, window_bounds = array<i64: 8, 256>}, {pipeline_mode = #tpu.pipeline_mode<synchronous>, transform_indices = @transform_1, window_bounds = array<i64: 32, 2>}, {pipeline_mode = #tpu.pipeline_mode<synchronous>, transform_indices = @transform_2, window_bounds = array<i64: 32, 4>}, {pipeline_mode = #tpu.pipeline_mode<synchronous>, transform_indices = @transform_3, window_bounds = array<i64: 32, 1>}, {transform_indices = @transform_4, window_bounds = array<i64: 1, 1, 2>}]} {
    %c0 = arith.constant 0 : index
    %c0_0 = arith.constant 0 : index
    %0 = vector.load %arg4[%c0, %c0_0] : memref<32x1xf32, #tpu.memory_space<vmem>>, vector<32x1xf32>
    %c0_1 = arith.constant 0 : index
    %c0_2 = arith.constant 0 : index
    %1 = vector.load %arg3[%c0_1, %c0_2] : memref<32x4xf32, #tpu.memory_space<vmem>>, vector<32x1xf32>
    %c0_3 = arith.constant 0 : index
    %c0_4 = arith.constant 0 : index
    %2 = vector.load %arg1[%c0_3, %c0_4] : memref<8x256xf32, #tpu.memory_space<vmem>>, vector<1x256xf32>
    %3 = vector.broadcast %1 : vector<32x1xf32> to vector<32x256xf32>
    %4 = vector.broadcast %2 : vector<1x256xf32> to vector<32x256xf32>
    %5 = arith.mulf %3, %4 : vector<32x256xf32>
    %c0_5 = arith.constant 0 : index
    %c1 = arith.constant 1 : index
    %6 = vector.load %arg3[%c0_5, %c1] : memref<32x4xf32, #tpu.memory_space<vmem>>, vector<32x1xf32>
    %c1_6 = arith.constant 1 : index
    %c0_7 = arith.constant 0 : index
    %7 = vector.load %arg1[%c1_6, %c0_7] : memref<8x256xf32, #tpu.memory_space<vmem>>, vector<1x256xf32>
    %8 = vector.broadcast %6 : vector<32x1xf32> to vector<32x256xf32>
    %9 = vector.broadcast %7 : vector<1x256xf32> to vector<32x256xf32>
    %10 = arith.mulf %8, %9 : vector<32x256xf32>
    %11 = arith.addf %5, %10 : vector<32x256xf32>
    %c0_8 = arith.constant 0 : index
    %c2 = arith.constant 2 : index
    %12 = vector.load %arg3[%c0_8, %c2] : memref<32x4xf32, #tpu.memory_space<vmem>>, vector<32x1xf32>
    %c2_9 = arith.constant 2 : index
    %c0_10 = arith.constant 0 : index
    %13 = vector.load %arg1[%c2_9, %c0_10] : memref<8x256xf32, #tpu.memory_space<vmem>>, vector<1x256xf32>
    %14 = vector.broadcast %12 : vector<32x1xf32> to vector<32x256xf32>
    %15 = vector.broadcast %13 : vector<1x256xf32> to vector<32x256xf32>
    %16 = arith.mulf %14, %15 : vector<32x256xf32>
    %17 = arith.addf %11, %16 : vector<32x256xf32>
    %c0_11 = arith.constant 0 : index
    %c3 = arith.constant 3 : index
    %18 = vector.load %arg3[%c0_11, %c3] : memref<32x4xf32, #tpu.memory_space<vmem>>, vector<32x1xf32>
    %c3_12 = arith.constant 3 : index
    %c0_13 = arith.constant 0 : index
    %19 = vector.load %arg1[%c3_12, %c0_13] : memref<8x256xf32, #tpu.memory_space<vmem>>, vector<1x256xf32>
    %20 = vector.broadcast %18 : vector<32x1xf32> to vector<32x256xf32>
    %21 = vector.broadcast %19 : vector<1x256xf32> to vector<32x256xf32>
    %22 = arith.mulf %20, %21 : vector<32x256xf32>
    %23 = arith.addf %17, %22 : vector<32x256xf32>
    %c0_14 = arith.constant 0 : index
    %c0_15 = arith.constant 0 : index
    %24 = vector.load %arg2[%c0_14, %c0_15] : memref<32x2xf32, #tpu.memory_space<vmem>>, vector<32x1xf32>
    %25 = vector.broadcast %24 : vector<32x1xf32> to vector<32x256xf32>
    %26 = arith.addf %23, %25 : vector<32x256xf32>
    %27 = arith.negf %26 : vector<32x256xf32>
    %28 = math.exp %27 : vector<32x256xf32>
    %cst = arith.constant 1.000000e+00 : f32
    %29 = vector.broadcast %cst : f32 to vector<32x256xf32>
    %30 = arith.addf %29, %28 : vector<32x256xf32>
    %31 = arith.divf %29, %30 : vector<32x256xf32>
    %32 = arith.mulf %26, %31 : vector<32x256xf32>
    %cst_16 = arith.constant dense<0.000000e+00> : vector<32xf32>
    %33 = vector.multi_reduction <add>, %32, %cst_16 [1] : vector<32x256xf32> to vector<32xf32>
    %34 = vector.shape_cast %33 : vector<32xf32> to vector<32x1xf32>
    %c0_17 = arith.constant 0 : index
    %c0_18 = arith.constant 0 : index
    %35 = vector.load %arg3[%c0_17, %c0_18] : memref<32x4xf32, #tpu.memory_space<vmem>>, vector<32x1xf32>
    %c4 = arith.constant 4 : index
    %c0_19 = arith.constant 0 : index
    %36 = vector.load %arg1[%c4, %c0_19] : memref<8x256xf32, #tpu.memory_space<vmem>>, vector<1x256xf32>
    %37 = vector.broadcast %35 : vector<32x1xf32> to vector<32x256xf32>
    %38 = vector.broadcast %36 : vector<1x256xf32> to vector<32x256xf32>
    %39 = arith.mulf %37, %38 : vector<32x256xf32>
    %c0_20 = arith.constant 0 : index
    %c1_21 = arith.constant 1 : index
    %40 = vector.load %arg3[%c0_20, %c1_21] : memref<32x4xf32, #tpu.memory_space<vmem>>, vector<32x1xf32>
    %c5 = arith.constant 5 : index
    %c0_22 = arith.constant 0 : index
    %41 = vector.load %arg1[%c5, %c0_22] : memref<8x256xf32, #tpu.memory_space<vmem>>, vector<1x256xf32>
    %42 = vector.broadcast %40 : vector<32x1xf32> to vector<32x256xf32>
    %43 = vector.broadcast %41 : vector<1x256xf32> to vector<32x256xf32>
    %44 = arith.mulf %42, %43 : vector<32x256xf32>
    %45 = arith.addf %39, %44 : vector<32x256xf32>
    %c0_23 = arith.constant 0 : index
    %c2_24 = arith.constant 2 : index
    %46 = vector.load %arg3[%c0_23, %c2_24] : memref<32x4xf32, #tpu.memory_space<vmem>>, vector<32x1xf32>
    %c6 = arith.constant 6 : index
    %c0_25 = arith.constant 0 : index
    %47 = vector.load %arg1[%c6, %c0_25] : memref<8x256xf32, #tpu.memory_space<vmem>>, vector<1x256xf32>
    %48 = vector.broadcast %46 : vector<32x1xf32> to vector<32x256xf32>
    %49 = vector.broadcast %47 : vector<1x256xf32> to vector<32x256xf32>
    %50 = arith.mulf %48, %49 : vector<32x256xf32>
    %51 = arith.addf %45, %50 : vector<32x256xf32>
    %c0_26 = arith.constant 0 : index
    %c3_27 = arith.constant 3 : index
    %52 = vector.load %arg3[%c0_26, %c3_27] : memref<32x4xf32, #tpu.memory_space<vmem>>, vector<32x1xf32>
    %c7 = arith.constant 7 : index
    %c0_28 = arith.constant 0 : index
    %53 = vector.load %arg1[%c7, %c0_28] : memref<8x256xf32, #tpu.memory_space<vmem>>, vector<1x256xf32>
    %54 = vector.broadcast %52 : vector<32x1xf32> to vector<32x256xf32>
    %55 = vector.broadcast %53 : vector<1x256xf32> to vector<32x256xf32>
    %56 = arith.mulf %54, %55 : vector<32x256xf32>
    %57 = arith.addf %51, %56 : vector<32x256xf32>
    %c0_29 = arith.constant 0 : index
    %c1_30 = arith.constant 1 : index
    %58 = vector.load %arg2[%c0_29, %c1_30] : memref<32x2xf32, #tpu.memory_space<vmem>>, vector<32x1xf32>
    %59 = vector.broadcast %58 : vector<32x1xf32> to vector<32x256xf32>
    %60 = arith.addf %57, %59 : vector<32x256xf32>
    %61 = arith.negf %60 : vector<32x256xf32>
    %62 = math.exp %61 : vector<32x256xf32>
    %cst_31 = arith.constant 1.000000e+00 : f32
    %63 = vector.broadcast %cst_31 : f32 to vector<32x256xf32>
    %64 = arith.addf %63, %62 : vector<32x256xf32>
    %65 = arith.divf %63, %64 : vector<32x256xf32>
    %66 = arith.mulf %60, %65 : vector<32x256xf32>
    %cst_32 = arith.constant dense<0.000000e+00> : vector<32xf32>
    %67 = vector.multi_reduction <add>, %66, %cst_32 [1] : vector<32x256xf32> to vector<32xf32>
    %68 = vector.shape_cast %67 : vector<32xf32> to vector<32x1xf32>
    %69 = tpu.concatenate %34, %68 in 1 : vector<32x1xf32>, vector<32x1xf32> -> vector<32x2xf32>
    %70 = vector.broadcast %0 : vector<32x1xf32> to vector<32x2xf32>
    %71 = arith.mulf %69, %70 : vector<32x2xf32>
    %cst_33 = arith.constant dense<0.000000e+00> : vector<2xf32>
    %72 = vector.multi_reduction <add>, %71, %cst_33 [0] : vector<32x2xf32> to vector<2xf32>
    %73 = vector.shape_cast %72 : vector<2xf32> to vector<1x2xf32>
    %cst_34 = arith.constant 3.906250e-03 : f32
    %74 = vector.broadcast %cst_34 : f32 to vector<1x2xf32>
    %75 = arith.mulf %73, %74 : vector<1x2xf32>
    %76 = vector.shape_cast %75 : vector<1x2xf32> to vector<1x1x2xf32>
    %c0_35 = arith.constant 0 : index
    %c0_36 = arith.constant 0 : index
    %c0_37 = arith.constant 0 : index
    %77 = vector.load %arg5[%c0_35, %c0_36, %c0_37] : memref<1x1x2xf32, #tpu.memory_space<vmem>>, vector<1x1x2xf32>
    tpu.vector_store %arg5[%c0_35, %c0_36, %c0_37], %76 {strides = array<i32>} : memref<1x1x2xf32, #tpu.memory_space<vmem>>, vector<1x1x2xf32>,
    return
  }
  func.func @transform_0(%arg0: i32) -> (i32, i32) {
    %c0_i32 = arith.constant 0 : i32
    %c0_i32_0 = arith.constant 0 : i32
    return %arg0, %c0_i32 : i32, i32
  }
  func.func @transform_1(%arg0: i32) -> (i32, i32) {
    %c0_i32 = arith.constant 0 : i32
    %c0_i32_0 = arith.constant 0 : i32
    %c0_i32_1 = arith.constant 0 : i32
    return %c0_i32, %c0_i32_0 : i32, i32
  }
  func.func @transform_2(%arg0: i32) -> (i32, i32) {
    %c0_i32 = arith.constant 0 : i32
    %c0_i32_0 = arith.constant 0 : i32
    %c0_i32_1 = arith.constant 0 : i32
    return %c0_i32, %c0_i32_0 : i32, i32
  }
  func.func @transform_3(%arg0: i32) -> (i32, i32) {
    %c0_i32 = arith.constant 0 : i32
    %c0_i32_0 = arith.constant 0 : i32
    %c0_i32_1 = arith.constant 0 : i32
    return %c0_i32, %c0_i32_0 : i32, i32
  }
  func.func @transform_4(%arg0: i32) -> (i32, i32, i32) {
    %c0_i32 = arith.constant 0 : i32
    %c0_i32_0 = arith.constant 0 : i32
    %c0_i32_1 = arith.constant 0 : i32
    return %arg0, %c0_i32, %c0_i32_0 : i32, i32, i32
  }
}

</mosaic_0001>

<llo_original>
// kernel: forward.1
$region0: #{forward.1}
  #allocation0 [shape = 'u32[]', space=smem, size = 0x4, offset = 0x4, fixed_abs, tag = 'smem constant byte address 0x4 - core index']
  #allocation1 [shape = 'u32[144,128]{1,0:T(1,128)}', space=vmem, size = 0x12000, scoped, tag = 'internal scratch']
  %s0 = inlined_call_operand.vmem [shape: f32[8,256], index: 0, kind: input, shape index: {}]
  %s1 = inlined_call_operand.vmem [shape: f32[32,2], index: 1, kind: input, shape index: {}]
  %s2 = inlined_call_operand.vmem [shape: f32[32,4], index: 2, kind: input, shape index: {}]
  %s3 = inlined_call_operand.vmem [shape: f32[32,1], index: 3, kind: input, shape index: {}]
  %s4 = inlined_call_operand.hbm [shape: f32[1,1,2], index: 4, kind: output, shape index: {}]
  %s5 = sld [smem:[#allocation0]]
  $region26: #{forward.1} parent=0
    _
  %s7 = ssub.s32 1, %s5
  %s8 = scalar_select 0, %s7, %s5
  $region1: #{forward.1} parent=0
    #allocation2 [shape = 'u8[512]{0}', space=vmem, size = 0x400, scoped, tag = 'output window, operand 0, single buffered']
    #allocation3 [shape = 's32[1]{0}', space=sflag, size = 0x4, scoped, tag = 'scoped memory for forward.1']
    %9 = vsyncpa [#allocation3], 0
    // Predicated region
    $region2: #{forward.1} parent=1 // pred_check
      _
    $region3: #{forward.1} parent=1 // pred_check_branch
      %11 = sbr.rel (0) target = $region5
    $region4: #{forward.1} parent=1 // pred_region
      _
    $region5: #{forward.1} parent=1 // pred_fallthru
      _
    // Predicated region
    $region6: #{forward.1} parent=1 // pred_check
      _
    $region7: #{forward.1} parent=1 // pred_check_branch
      %13 = sbr.rel (0) target = $region9
    $region8: #{forward.1} parent=1 // pred_region
      _
    $region9: #{forward.1} parent=1 // pred_fallthru
      _
    // Predicated region
    $region10: #{forward.1} parent=1 // pred_check
      _
    $region11: #{forward.1} parent=1 // pred_check_branch
      %15 = sbr.rel (0) target = $region13
    $region12: #{forward.1} parent=1 // pred_region
      _
    $region13: #{forward.1} parent=1 // pred_fallthru
      _
    // Predicated region
    $region14: #{forward.1} parent=1 // pred_check
      _
    $region15: #{forward.1} parent=1 // pred_check_branch
      %17 = sbr.rel (0) target = $region17
    $region16: #{forward.1} parent=1 // pred_region
      _
    $region17: #{forward.1} parent=1 // pred_fallthru
      _
    %v18 = vld [vmem:[%s3] sm:$0xff]
    %v19 = vld [vmem:[%s3 + $0x8] sm:$0xff]
    %v20 = vld [vmem:[%s3 + $0x10] sm:$0xff]
    %v21 = vld [vmem:[%s3 + $0x18] sm:$0xff]
    %v22 = vld [vmem:[%s2] sm:$0xff]
    %v23 = vld [vmem:[%s2 + $0x8] sm:$0xff]
    %v24 = vld [vmem:[%s2 + $0x10] sm:$0xff]
    %v25 = vld [vmem:[%s2 + $0x18] sm:$0xff]
    %v26 = vld [vmem:[%s0] ss:$8 sm:$0x3]
    %28 = vset.pattern.permute.xlu0 0
    %29 = vperm.xlu0 %28, %v22
    %v30 = vpop.permute.xlu0 %29
    %33 = vset.pattern.permute.xlu0 0
    %34 = vperm.xlu0 %33, %v23
    %v35 = vpop.permute.xlu0 %34
    %38 = vset.pattern.permute.xlu0 0
    %39 = vperm.xlu0 %38, %v24
    %v40 = vpop.permute.xlu0 %39
    %43 = vset.pattern.permute.xlu0 0
    %44 = vperm.xlu0 %43, %v25
    %v45 = vpop.permute.xlu0 %44
    %v48 = vlaneseq
    %v49 = vshrl.u32 %v48, 7
    %v50 = vsub.s32 0, %v49
    %v51 = vrot.slane %v26, %v50
    %v52 = vlaneseq
    %v53 = vshrl.u32 %v52, 7
    %v54 = vsub.s32 1, %v53
    %v55 = vrot.slane %v26, %v54
    %v58 = vmul.f32 %v30, %v51
    %v59 = vmul.f32 %v30, %v55
    %v60 = vmul.f32 %v35, %v51
    %v61 = vmul.f32 %v35, %v55
    %v62 = vmul.f32 %v40, %v51
    %v63 = vmul.f32 %v40, %v55
    %v64 = vmul.f32 %v45, %v51
    %v65 = vmul.f32 %v45, %v55
    %s66 = scalar_lea.vmem %s0, 1
    %v67 = vld [vmem:[%s66] ss:$8 sm:$0x3]
    %68 = vset.pattern.permute.xlu0 1
    %69 = vperm.xlu0 %68, %v22
    %v70 = vpop.permute.xlu0 %69
    %72 = vset.pattern.permute.xlu0 1
    %73 = vperm.xlu0 %72, %v23
    %v74 = vpop.permute.xlu0 %73
    %76 = vset.pattern.permute.xlu0 1
    %77 = vperm.xlu0 %76, %v24
    %v78 = vpop.permute.xlu0 %77
    %80 = vset.pattern.permute.xlu0 1
    %81 = vperm.xlu0 %80, %v25
    %v82 = vpop.permute.xlu0 %81
    %v85 = vlaneseq
    %v86 = vshrl.u32 %v85, 7
    %v87 = vsub.s32 0, %v86
    %v88 = vrot.slane %v67, %v87
    %v89 = vlaneseq
    %v90 = vshrl.u32 %v89, 7
    %v91 = vsub.s32 1, %v90
    %v92 = vrot.slane %v67, %v91
    %v95 = vmul.f32 %v70, %v88
    %v96 = vmul.f32 %v70, %v92
    %v97 = vmul.f32 %v74, %v88
    %v98 = vmul.f32 %v74, %v92
    %v99 = vmul.f32 %v78, %v88
    %v100 = vmul.f32 %v78, %v92
    %v101 = vmul.f32 %v82, %v88
    %v102 = vmul.f32 %v82, %v92
    %v103 = vadd.f32 %v58, %v95
    %v104 = vadd.f32 %v59, %v96
    %v105 = vadd.f32 %v60, %v97
    %v106 = vadd.f32 %v61, %v98
    %v107 = vadd.f32 %v62, %v99
    %v108 = vadd.f32 %v63, %v100
    %v109 = vadd.f32 %v64, %v101
    %v110 = vadd.f32 %v65, %v102
    %s111 = scalar_lea.vmem %s0, 2
    %v112 = vld [vmem:[%s111] ss:$8 sm:$0x3]
    %113 = vset.pattern.permute.xlu0 2
    %114 = vperm.xlu0 %113, %v22
    %v115 = vpop.permute.xlu0 %114
    %117 = vset.pattern.permute.xlu0 2
    %118 = vperm.xlu0 %117, %v23
    %v119 = vpop.permute.xlu0 %118
    %121 = vset.pattern.permute.xlu0 2
    %122 = vperm.xlu0 %121, %v24
    %v123 = vpop.permute.xlu0 %122
    %125 = vset.pattern.permute.xlu0 2
    %126 = vperm.xlu0 %125, %v25
    %v127 = vpop.permute.xlu0 %126
    %v130 = vlaneseq
    %v131 = vshrl.u32 %v130, 7
    %v132 = vsub.s32 0, %v131
    %v133 = vrot.slane %v112, %v132
    %v134 = vlaneseq
    %v135 = vshrl.u32 %v134, 7
    %v136 = vsub.s32 1, %v135
    %v137 = vrot.slane %v112, %v136
    %v140 = vmul.f32 %v115, %v133
    %v141 = vmul.f32 %v115, %v137
    %v142 = vmul.f32 %v119, %v133
    %v143 = vmul.f32 %v119, %v137
    %v144 = vmul.f32 %v123, %v133
    %v145 = vmul.f32 %v123, %v137
    %v146 = vmul.f32 %v127, %v133
    %v147 = vmul.f32 %v127, %v137
    %v148 = vadd.f32 %v103, %v140
    %v149 = vadd.f32 %v104, %v141
    %v150 = vadd.f32 %v105, %v142
    %v151 = vadd.f32 %v106, %v143
    %v152 = vadd.f32 %v107, %v144
    %v153 = vadd.f32 %v108, %v145
    %v154 = vadd.f32 %v109, %v146
    %v155 = vadd.f32 %v110, %v147
    %s156 = scalar_lea.vmem %s0, 3
    %v157 = vld [vmem:[%s156] ss:$8 sm:$0x3]
    %158 = vset.pattern.permute.xlu0 3
    %159 = vperm.xlu0 %158, %v22
    %v160 = vpop.permute.xlu0 %159
    %162 = vset.pattern.permute.xlu0 3
    %163 = vperm.xlu0 %162, %v23
    %v164 = vpop.permute.xlu0 %163
    %166 = vset.pattern.permute.xlu0 3
    %167 = vperm.xlu0 %166, %v24
    %v168 = vpop.permute.xlu0 %167
    %170 = vset.pattern.permute.xlu0 3
    %171 = vperm.xlu0 %170, %v25
    %v172 = vpop.permute.xlu0 %171
    %v175 = vlaneseq
    %v176 = vshrl.u32 %v175, 7
    %v177 = vsub.s32 0, %v176
    %v178 = vrot.slane %v157, %v177
    %v179 = vlaneseq
    %v180 = vshrl.u32 %v179, 7
    %v181 = vsub.s32 1, %v180
    %v182 = vrot.slane %v157, %v181
    %v185 = vmul.f32 %v160, %v178
    %v186 = vmul.f32 %v160, %v182
    %v187 = vmul.f32 %v164, %v178
    %v188 = vmul.f32 %v164, %v182
    %v189 = vmul.f32 %v168, %v178
    %v190 = vmul.f32 %v168, %v182
    %v191 = vmul.f32 %v172, %v178
    %v192 = vmul.f32 %v172, %v182
    %v193 = vadd.f32 %v148, %v185
    %v194 = vadd.f32 %v149, %v186
    %v195 = vadd.f32 %v150, %v187
    %v196 = vadd.f32 %v151, %v188
    %v197 = vadd.f32 %v152, %v189
    %v198 = vadd.f32 %v153, %v190
    %v199 = vadd.f32 %v154, %v191
    %v200 = vadd.f32 %v155, %v192
    %v201 = vld [vmem:[%s1] sm:$0xff]
    %v202 = vld [vmem:[%s1 + $0x8] sm:$0xff]
    %v203 = vld [vmem:[%s1 + $0x10] sm:$0xff]
    %v204 = vld [vmem:[%s1 + $0x18] sm:$0xff]
    %206 = vset.pattern.permute.xlu0 0
    %207 = vperm.xlu0 %206, %v201
    %v208 = vpop.permute.xlu0 %207
    %211 = vset.pattern.permute.xlu0 0
    %212 = vperm.xlu0 %211, %v202
    %v213 = vpop.permute.xlu0 %212
    %216 = vset.pattern.permute.xlu0 0
    %217 = vperm.xlu0 %216, %v203
    %v218 = vpop.permute.xlu0 %217
    %221 = vset.pattern.permute.xlu0 0
    %222 = vperm.xlu0 %221, %v204
    %v223 = vpop.permute.xlu0 %222
    %v225 = vadd.f32 %v193, %v208
    %v226 = vadd.f32 %v194, %v208
    %v227 = vadd.f32 %v195, %v213
    %v228 = vadd.f32 %v196, %v213
    %v229 = vadd.f32 %v197, %v218
    %v230 = vadd.f32 %v198, %v218
    %v231 = vadd.f32 %v199, %v223
    %v232 = vadd.f32 %v200, %v223
    %v233 = vxor.u32 %v225, 2147483648
    %v234 = vxor.u32 %v226, 2147483648
    %v235 = vxor.u32 %v227, 2147483648
    %v236 = vxor.u32 %v228, 2147483648
    %v237 = vxor.u32 %v229, 2147483648
    %v238 = vxor.u32 %v230, 2147483648
    %v239 = vxor.u32 %v231, 2147483648
    %v240 = vxor.u32 %v232, 2147483648
    %v241 = vmul.f32 %v233, 1.442695
    %v242 = vpow.pop %v241
    %v243 = vmul.f32 %v234, 1.442695
    %v244 = vpow.pop %v243
    %v245 = vmul.f32 %v235, 1.442695
    %v246 = vpow.pop %v245
    %v247 = vmul.f32 %v236, 1.442695
    %v248 = vpow.pop %v247
    %v249 = vmul.f32 %v237, 1.442695
    %v250 = vpow.pop %v249
    %v251 = vmul.f32 %v238, 1.442695
    %v252 = vpow.pop %v251
    %v253 = vmul.f32 %v239, 1.442695
    %v254 = vpow.pop %v253
    %v255 = vmul.f32 %v240, 1.442695
    %v256 = vpow.pop %v255
    %v257 = vadd.f32 %v242, 1.0
    %v258 = vadd.f32 %v244, 1.0
    %v259 = vadd.f32 %v246, 1.0
    %v260 = vadd.f32 %v248, 1.0
    %v261 = vadd.f32 %v250, 1.0
    %v262 = vadd.f32 %v252, 1.0
    %v263 = vadd.f32 %v254, 1.0
    %v264 = vadd.f32 %v256, 1.0
    %v265 = vrcp.pop %v257
    %v266 = vmul.f32 1.0, %v265
    %v267 = vrcp.pop %v258
    %v268 = vmul.f32 1.0, %v267
    %v269 = vrcp.pop %v259
    %v270 = vmul.f32 1.0, %v269
    %v271 = vrcp.pop %v260
    %v272 = vmul.f32 1.0, %v271
    %v273 = vrcp.pop %v261
    %v274 = vmul.f32 1.0, %v273
    %v275 = vrcp.pop %v262
    %v276 = vmul.f32 1.0, %v275
    %v277 = vrcp.pop %v263
    %v278 = vmul.f32 1.0, %v277
    %v279 = vrcp.pop %v264
    %v280 = vmul.f32 1.0, %v279
    %v281 = vmul.f32 %v225, %v266
    %v282 = vmul.f32 %v226, %v268
    %v283 = vmul.f32 %v227, %v270
    %v284 = vmul.f32 %v228, %v272
    %v285 = vmul.f32 %v229, %v274
    %v286 = vmul.f32 %v230, %v276
    %v287 = vmul.f32 %v231, %v278
    %v288 = vmul.f32 %v232, %v280
    %v289 = vadd.f32 %v281, %v282
    %290 = vadd.xlane.f32.xlu0 %v289
    %v291 = vpop.xlane.xlu0 %290
    %v292 = vadd.f32 %v283, %v284
    %293 = vadd.xlane.f32.xlu0 %v292
    %v294 = vpop.xlane.xlu0 %293
    %v295 = vadd.f32 %v285, %v286
    %296 = vadd.xlane.f32.xlu0 %v295
    %v297 = vpop.xlane.xlu0 %296
    %v298 = vadd.f32 %v287, %v288
    %299 = vadd.xlane.f32.xlu0 %v298
    %v300 = vpop.xlane.xlu0 %299
    %s301 = scalar_lea.vmem %s0, 4
    %v302 = vld [vmem:[%s301] ss:$8 sm:$0x3]
    %v304 = vlaneseq
    %v305 = vshrl.u32 %v304, 7
    %v306 = vsub.s32 0, %v305
    %v307 = vrot.slane %v302, %v306
    %v308 = vlaneseq
    %v309 = vshrl.u32 %v308, 7
    %v310 = vsub.s32 1, %v309
    %v311 = vrot.slane %v302, %v310
    %v314 = vmul.f32 %v30, %v307
    %v315 = vmul.f32 %v30, %v311
    %v316 = vmul.f32 %v35, %v307
    %v317 = vmul.f32 %v35, %v311
    %v318 = vmul.f32 %v40, %v307
    %v319 = vmul.f32 %v40, %v311
    %v320 = vmul.f32 %v45, %v307
    %v321 = vmul.f32 %v45, %v311
    %s322 = scalar_lea.vmem %s0, 5
    %v323 = vld [vmem:[%s322] ss:$8 sm:$0x3]
    %v325 = vlaneseq
    %v326 = vshrl.u32 %v325, 7
    %v327 = vsub.s32 0, %v326
    %v328 = vrot.slane %v323, %v327
    %v329 = vlaneseq
    %v330 = vshrl.u32 %v329, 7
    %v331 = vsub.s32 1, %v330
    %v332 = vrot.slane %v323, %v331
    %v335 = vmul.f32 %v70, %v328
    %v336 = vmul.f32 %v70, %v332
    %v337 = vmul.f32 %v74, %v328
    %v338 = vmul.f32 %v74, %v332
    %v339 = vmul.f32 %v78, %v328
    %v340 = vmul.f32 %v78, %v332
    %v341 = vmul.f32 %v82, %v328
    %v342 = vmul.f32 %v82, %v332
    %v343 = vadd.f32 %v314, %v335
    %v344 = vadd.f32 %v315, %v336
    %v345 = vadd.f32 %v316, %v337
    %v346 = vadd.f32 %v317, %v338
    %v347 = vadd.f32 %v318, %v339
    %v348 = vadd.f32 %v319, %v340
    %v349 = vadd.f32 %v320, %v341
    %v350 = vadd.f32 %v321, %v342
    %s351 = scalar_lea.vmem %s0, 6
    %v352 = vld [vmem:[%s351] ss:$8 sm:$0x3]
    %v354 = vlaneseq
    %v355 = vshrl.u32 %v354, 7
    %v356 = vsub.s32 0, %v355
    %v357 = vrot.slane %v352, %v356
    %v358 = vlaneseq
    %v359 = vshrl.u32 %v358, 7
    %v360 = vsub.s32 1, %v359
    %v361 = vrot.slane %v352, %v360
    %v364 = vmul.f32 %v115, %v357
    %v365 = vmul.f32 %v115, %v361
    %v366 = vmul.f32 %v119, %v357
    %v367 = vmul.f32 %v119, %v361
    %v368 = vmul.f32 %v123, %v357
    %v369 = vmul.f32 %v123, %v361
    %v370 = vmul.f32 %v127, %v357
    %v371 = vmul.f32 %v127, %v361
    %v372 = vadd.f32 %v343, %v364
    %v373 = vadd.f32 %v344, %v365
    %v374 = vadd.f32 %v345, %v366
    %v375 = vadd.f32 %v346, %v367
    %v376 = vadd.f32 %v347, %v368
    %v377 = vadd.f32 %v348, %v369
    %v378 = vadd.f32 %v349, %v370
    %v379 = vadd.f32 %v350, %v371
    %s380 = scalar_lea.vmem %s0, 7
    %v381 = vld [vmem:[%s380] ss:$8 sm:$0x3]
    %v383 = vlaneseq
    %v384 = vshrl.u32 %v383, 7
    %v385 = vsub.s32 0, %v384
    %v386 = vrot.slane %v381, %v385
    %v387 = vlaneseq
    %v388 = vshrl.u32 %v387, 7
    %v389 = vsub.s32 1, %v388
    %v390 = vrot.slane %v381, %v389
    %v393 = vmul.f32 %v160, %v386
    %v394 = vmul.f32 %v160, %v390
    %v395 = vmul.f32 %v164, %v386
    %v396 = vmul.f32 %v164, %v390
    %v397 = vmul.f32 %v168, %v386
    %v398 = vmul.f32 %v168, %v390
    %v399 = vmul.f32 %v172, %v386
    %v400 = vmul.f32 %v172, %v390
    %v401 = vadd.f32 %v372, %v393
    %v402 = vadd.f32 %v373, %v394
    %v403 = vadd.f32 %v374, %v395
    %v404 = vadd.f32 %v375, %v396
    %v405 = vadd.f32 %v376, %v397
    %v406 = vadd.f32 %v377, %v398
    %v407 = vadd.f32 %v378, %v399
    %v408 = vadd.f32 %v379, %v400
    %409 = vset.pattern.permute.xlu0 1
    %410 = vperm.xlu0 %409, %v201
    %v411 = vpop.permute.xlu0 %410
    %413 = vset.pattern.permute.xlu0 1
    %414 = vperm.xlu0 %413, %v202
    %v415 = vpop.permute.xlu0 %414
    %417 = vset.pattern.permute.xlu0 1
    %418 = vperm.xlu0 %417, %v203
    %v419 = vpop.permute.xlu0 %418
    %421 = vset.pattern.permute.xlu0 1
    %422 = vperm.xlu0 %421, %v204
    %v423 = vpop.permute.xlu0 %422
    %v425 = vadd.f32 %v401, %v411
    %v426 = vadd.f32 %v402, %v411
    %v427 = vadd.f32 %v403, %v415
    %v428 = vadd.f32 %v404, %v415
    %v429 = vadd.f32 %v405, %v419
    %v430 = vadd.f32 %v406, %v419
    %v431 = vadd.f32 %v407, %v423
    %v432 = vadd.f32 %v408, %v423
    %v433 = vxor.u32 %v425, 2147483648
    %v434 = vxor.u32 %v426, 2147483648
    %v435 = vxor.u32 %v427, 2147483648
    %v436 = vxor.u32 %v428, 2147483648
    %v437 = vxor.u32 %v429, 2147483648
    %v438 = vxor.u32 %v430, 2147483648
    %v439 = vxor.u32 %v431, 2147483648
    %v440 = vxor.u32 %v432, 2147483648
    %v441 = vmul.f32 %v433, 1.442695
    %v442 = vpow.pop %v441
    %v443 = vmul.f32 %v434, 1.442695
    %v444 = vpow.pop %v443
    %v445 = vmul.f32 %v435, 1.442695
    %v446 = vpow.pop %v445
    %v447 = vmul.f32 %v436, 1.442695
    %v448 = vpow.pop %v447
    %v449 = vmul.f32 %v437, 1.442695
    %v450 = vpow.pop %v449
    %v451 = vmul.f32 %v438, 1.442695
    %v452 = vpow.pop %v451
    %v453 = vmul.f32 %v439, 1.442695
    %v454 = vpow.pop %v453
    %v455 = vmul.f32 %v440, 1.442695
    %v456 = vpow.pop %v455
    %v457 = vadd.f32 %v442, 1.0
    %v458 = vadd.f32 %v444, 1.0
    %v459 = vadd.f32 %v446, 1.0
    %v460 = vadd.f32 %v448, 1.0
    %v461 = vadd.f32 %v450, 1.0
    %v462 = vadd.f32 %v452, 1.0
    %v463 = vadd.f32 %v454, 1.0
    %v464 = vadd.f32 %v456, 1.0
    %v465 = vrcp.pop %v457
    %v466 = vmul.f32 1.0, %v465
    %v467 = vrcp.pop %v458
    %v468 = vmul.f32 1.0, %v467
    %v469 = vrcp.pop %v459
    %v470 = vmul.f32 1.0, %v469
    %v471 = vrcp.pop %v460
    %v472 = vmul.f32 1.0, %v471
    %v473 = vrcp.pop %v461
    %v474 = vmul.f32 1.0, %v473
    %v475 = vrcp.pop %v462
    %v476 = vmul.f32 1.0, %v475
    %v477 = vrcp.pop %v463
    %v478 = vmul.f32 1.0, %v477
    %v479 = vrcp.pop %v464
    %v480 = vmul.f32 1.0, %v479
    %v481 = vmul.f32 %v425, %v466
    %v482 = vmul.f32 %v426, %v468
    %v483 = vmul.f32 %v427, %v470
    %v484 = vmul.f32 %v428, %v472
    %v485 = vmul.f32 %v429, %v474
    %v486 = vmul.f32 %v430, %v476
    %v487 = vmul.f32 %v431, %v478
    %v488 = vmul.f32 %v432, %v480
    %v489 = vadd.f32 %v481, %v482
    %490 = vadd.xlane.f32.xlu0 %v489
    %v491 = vpop.xlane.xlu0 %490
    %v492 = vadd.f32 %v483, %v484
    %493 = vadd.xlane.f32.xlu0 %v492
    %v494 = vpop.xlane.xlu0 %493
    %v495 = vadd.f32 %v485, %v486
    %496 = vadd.xlane.f32.xlu0 %v495
    %v497 = vpop.xlane.xlu0 %496
    %v498 = vadd.f32 %v487, %v488
    %499 = vadd.xlane.f32.xlu0 %v498
    %v500 = vpop.xlane.xlu0 %499
    %vm501 = vcmask 7168
    %v502 = vsel %vm501, %v291, %v491
    %v503 = vsel %vm501, %v294, %v494
    %v504 = vsel %vm501, %v297, %v497
    %v505 = vsel %vm501, %v300, %v500
    %507 = vset.pattern.permute.xlu0 0
    %508 = vperm.xlu0 %507, %v18
    %v509 = vpop.permute.xlu0 %508
    %512 = vset.pattern.permute.xlu0 0
    %513 = vperm.xlu0 %512, %v19
    %v514 = vpop.permute.xlu0 %513
    %517 = vset.pattern.permute.xlu0 0
    %518 = vperm.xlu0 %517, %v20
    %v519 = vpop.permute.xlu0 %518
    %522 = vset.pattern.permute.xlu0 0
    %523 = vperm.xlu0 %522, %v21
    %v524 = vpop.permute.xlu0 %523
    %v526 = vmul.f32 %v502, %v509
    %v527 = vmul.f32 %v503, %v514
    %v528 = vmul.f32 %v504, %v519
    %v529 = vmul.f32 %v505, %v524
    %vm530 = vcmask 15360
    %v531 = vsel %vm530, %v526, 0.0
    %v532 = vsel %vm530, %v527, 0.0
    %v533 = vadd.f32 %v531, %v532
    %v534 = vsel %vm530, %v528, 0.0
    %v535 = vadd.f32 %v533, %v534
    %v536 = vsel %vm530, %v529, 0.0
    %v537 = vadd.f32 %v535, %v536
    %v538 = vrot.slane %v537, 4
    %v539 = vadd.f32 %v537, %v538
    %v540 = vrot.slane %v539, 2
    %v541 = vadd.f32 %v539, %v540
    %v542 = vrot.slane %v541, 1
    %v543 = vadd.f32 %v541, %v542
    %v544 = vmul.f32 %v543, 0.00390625
    %vm545 = vcmask 8192
    %546 = vst.msk [vmem:[#allocation2] sm:$0x1] %vm545, %v544
    // Predicated region
    $region18: #{forward.1} parent=1 // pred_check
      _
    $region19: #{forward.1} parent=1 // pred_check_branch
      %548 = sbr.rel (0) target = $region21
    $region20: #{forward.1} parent=1 // pred_region
      %s550 = ssub.s32 16, 16
      %551 = vsyncadd [#allocation3], %s550
      %s553 = sshll.u32 [#allocation2], 4
      %s554 = int_to_ptr.vmem [resolvable:$true] %s553
      %556 = dma.vmem_to_hbm [thread:$0]  %s554, 16, %s4, [#allocation3]
    $region21: #{forward.1} parent=1 // pred_fallthru
      _
    // Predicated region
    $region22: #{forward.1} parent=1 // pred_check
      _
    $region23: #{forward.1} parent=1 // pred_check_branch
      %558 = sbr.rel (0) target = $region25
    $region24: #{forward.1} parent=1 // pred_region
      %559 = dma.done [#allocation3], 16
    $region25: #{forward.1} parent=1 // pred_fallthru
      _
    %560 = vsyncpa [#allocation3], 1

</llo_original>
